<compile_context>
chip_gen: v7x
topology: tpu7x:2x2x1
jax: 0.10.0
libtpu: 0.0.40
codegen_flags: <defaults>
</compile_context>

<pallas_src>
import jax
import jax.numpy as jnp
from jax.experimental import pallas as pl
from jax.experimental.pallas import tpu as pltpu

LANES = 128
_N_CORE_SPLIT = 2  # shard the pass-1 reduction across (up to) 2 TensorCores (v7x)


def _round_up(a: int, b: int) -> int:
    return ((a + b - 1) // b) * b


# ----------------------------------------------------------------------------------
# Fused single-pass kernel: whole array resident in VMEM.
# ----------------------------------------------------------------------------------
def _fused_softmax_kernel(x_ref, o_ref):
    e = jnp.exp(x_ref[...].astype(jnp.float32))          # (rows, 128)  EUP
    total = jnp.sum(e)                                    # full reduce
    o_ref[...] = (e * (1.0 / total)).astype(o_ref.dtype)  # exact reciprocal, lane-dense store


# ----------------------------------------------------------------------------------
# Two-pass streaming kernels.
# ----------------------------------------------------------------------------------
def _sum_exp_kernel(x_ref, part_ref, acc_ref):
    """Pass 1: per-core partial sum of exp(x). grid = (core, chunk); chunk is 'arbitrary'."""
    k = pl.program_id(1)

    @pl.when(k == 0)
    def _init():
        acc_ref[...] = jnp.zeros_like(acc_ref)

    e = jnp.exp(x_ref[...].astype(jnp.float32))                  # (tile_rows, 128)
    # Fold groups of 8 rows with pure VPU vreg adds into the resident (8,128) accumulator;
    # the cross-sublane/cross-lane collapse is deferred to the wrapper.
    acc_ref[...] += jnp.sum(e.reshape(-1, 8, LANES), axis=0)     # (8, 128)

    @pl.when(k == pl.num_programs(1) - 1)
    def _finalize():
        part_ref[...] = acc_ref[...]                             # per-core (8,128) partials


def _normalize_kernel(x_ref, inv_ref, o_ref):
    """Pass 2: out = exp(x) * inv_sum (inv_sum precomputed exactly, lives in SMEM)."""
    inv = inv_ref[0]
    e = jnp.exp(x_ref[...].astype(jnp.float32))                  # (tile_rows, 128)
    o_ref[...] = (e * inv).astype(o_ref.dtype)                   # lane-dense unmasked store


# ----------------------------------------------------------------------------------
# Wrapper
# ----------------------------------------------------------------------------------
def my_softmax(data: jax.Array,
               tile_rows: int = 2048,
               fused_bytes_limit: int = 8 << 20) -> jax.Array:
    """data: 1-D array [N]. Returns exp(data) / sum(exp(data)) (naive, no max-subtract)."""
    assert data.ndim == 1
    n = data.shape[0]
    dtype = data.dtype
    itemsize = jnp.dtype(dtype).itemsize
    row_mult = max(8, 32 // itemsize)          # sublane packing: 8 f32 / 16 bf16 / 32 int8

    rows_needed = pl.cdiv(n, LANES)

    # ---------------- fused single-pass VMEM-resident fast path ----------------------
    rows_fused = _round_up(max(rows_needed, 1), row_mult)
    fused_f32_bytes = rows_fused * LANES * 4
    if fused_f32_bytes <= fused_bytes_limit:
        n_padded = rows_fused * LANES
        x = data if n_padded == n else jnp.pad(data, (0, n_padded - n),
                                               constant_values=-jnp.inf)
        x2d = x.reshape(rows_fused, LANES)
        vmem_limit = min(max(3 * fused_f32_bytes + rows_fused * LANES * itemsize + (4 << 20),
                             16 << 20), 48 << 20)
        out2d = pl.pallas_call(
            _fused_softmax_kernel,
            out_shape=jax.ShapeDtypeStruct((rows_fused, LANES), dtype),
            in_specs=[pl.BlockSpec((rows_fused, LANES), lambda: (0, 0))],
            out_specs=pl.BlockSpec((rows_fused, LANES), lambda: (0, 0)),
            compiler_params=pltpu.CompilerParams(vmem_limit_bytes=vmem_limit),
        )(x2d)
        return out2d.reshape(n_padded)[:n]

    # ---------------- two-pass streaming path (large N) ------------------------------
    tile_rows = max(row_mult,
                    _round_up(min(tile_rows, _round_up(rows_needed, row_mult)), row_mult))
    n_chunks = pl.cdiv(rows_needed, tile_rows)
    chunks_per_core = pl.cdiv(n_chunks, _N_CORE_SPLIT)
    n_chunks = _N_CORE_SPLIT * chunks_per_core
    rows_total = n_chunks * tile_rows
    n_padded = rows_total * LANES

    # Pad with -inf: exp(-inf)=0, so padded elements neither corrupt the denominator nor
    # produce garbage in the (sliced-off) output.
    x = data if n_padded == n else jnp.pad(data, (0, n_padded - n),
                                           constant_values=-jnp.inf)
    x2d = x.reshape(rows_total, LANES)

    tile_in_bytes = tile_rows * LANES * itemsize
    tile_f32_bytes = tile_rows * LANES * 4

    # ---- pass 1: per-core partial sums of exp(x); chunk axis is the reduction --------
    vmem1 = min(max(2 * tile_in_bytes + 2 * tile_f32_bytes + (2 << 20), 16 << 20), 48 << 20)
    partials = pl.pallas_call(
        _sum_exp_kernel,
        out_shape=jax.ShapeDtypeStruct((_N_CORE_SPLIT * 8, LANES), jnp.float32),
        grid_spec=pltpu.PrefetchScalarGridSpec(
            num_scalar_prefetch=0,
            grid=(_N_CORE_SPLIT, chunks_per_core),
            in_specs=[pl.BlockSpec((tile_rows, LANES),
                                   lambda c, k: (c * chunks_per_core + k, 0))],
            out_specs=pl.BlockSpec((8, LANES), lambda c, k: (c, 0)),
            scratch_shapes=[pltpu.VMEM((8, LANES), jnp.float32)],
        ),
        compiler_params=pltpu.CompilerParams(
            dimension_semantics=("parallel", "arbitrary"),
            vmem_limit_bytes=vmem1,
        ),
    )(x2d)

    # Cross-core + cross-lane collapse and EXACT reciprocal (tiny scalar XLA op).
    inv = (1.0 / jnp.sum(partials)).reshape((1,)).astype(jnp.float32)

    # ---- pass 2: normalize; embarrassingly parallel over chunks ----------------------
    vmem2 = min(max(4 * tile_in_bytes + tile_f32_bytes + (2 << 20), 16 << 20), 48 << 20)
    out2d = pl.pallas_call(
        _normalize_kernel,
        out_shape=jax.ShapeDtypeStruct((rows_total, LANES), dtype),
        grid_spec=pltpu.PrefetchScalarGridSpec(
            num_scalar_prefetch=0,
            grid=(n_chunks,),
            in_specs=[
                pl.BlockSpec((tile_rows, LANES), lambda i: (i, 0)),
                pl.BlockSpec(memory_space=pltpu.MemorySpace.SMEM),   # (1,) reciprocal scalar
            ],
            out_specs=pl.BlockSpec((tile_rows, LANES), lambda i: (i, 0)),
        ),
        compiler_params=pltpu.CompilerParams(
            dimension_semantics=("parallel",),
            vmem_limit_bytes=vmem2,
        ),
    )(x2d, inv)

    return out2d.reshape(n_padded)[:n]


if __name__ == "__main__":
    key = jax.random.PRNGKey(0)

    # Small 1-D input consistent with the module's forward (seq=8) -> fused fast path.
    data = jax.random.normal(key, (8,), dtype=jnp.float32)
    out = jax.block_until_ready(my_softmax(data))
    ref = jnp.exp(data) / jnp.sum(jnp.exp(data))
    assert jnp.allclose(out, ref, rtol=1e-3, atol=1e-6), (out, ref)

    # Exercise the two-pass path: 2-core-split reduction, multi-chunk grid, -inf padding.
    data2 = jax.random.normal(jax.random.PRNGKey(1), (2000,), dtype=jnp.float32)
    out2 = jax.block_until_ready(my_softmax(data2, tile_rows=8, fused_bytes_limit=0))
    ref2 = jnp.exp(data2) / jnp.sum(jnp.exp(data2))
    assert jnp.allclose(out2, ref2, rtol=1e-3, atol=1e-6), float(jnp.max(jnp.abs(out2 - ref2)))

    print("KERNEL_OK")
</pallas_src>

<mosaic_0001>
module attributes {stable_mosaic.version = 11 : i64} {
  func.func @_fused_softmax_kernel(%arg0: memref<8x128xf32, #tpu.memory_space<vmem>>, %arg1: memref<8x128xf32, #tpu.memory_space<vmem>>) attributes {dimension_semantics = [], scalar_prefetch = 0 : i64, scratch_operands = 0 : i64, tpu.core_type = #tpu.core_type<tc>} {
    %c0 = arith.constant 0 : index
    %c0_0 = arith.constant 0 : index
    %0 = vector.load %arg0[%c0, %c0_0] : memref<8x128xf32, #tpu.memory_space<vmem>>, vector<8x128xf32>
    %1 = math.exp %0 : vector<8x128xf32>
    %2 = vector.shape_cast %1 : vector<8x128xf32> to vector<1x8x128xf32>
    %cst = arith.constant dense<0.000000e+00> : vector<1xf32>
    %3 = vector.multi_reduction <add>, %2, %cst [1, 2] : vector<1x8x128xf32> to vector<1xf32>
    %4 = vector.shape_cast %3 : vector<1xf32> to vector<1x1x1xf32>
    %5 = vector.extract %4[0, 0, 0] : f32 from vector<1x1x1xf32>
    %cst_1 = arith.constant 1.000000e+00 : f32
    %6 = arith.divf %cst_1, %5 : f32
    %7 = vector.broadcast %6 : f32 to vector<8x128xf32>
    %8 = arith.mulf %1, %7 : vector<8x128xf32>
    %c0_2 = arith.constant 0 : index
    %c0_3 = arith.constant 0 : index
    %9 = vector.load %arg1[%c0_2, %c0_3] : memref<8x128xf32, #tpu.memory_space<vmem>>, vector<8x128xf32>
    tpu.vector_store %arg1[%c0_2, %c0_3], %8 {strides = array<i32>} : memref<8x128xf32, #tpu.memory_space<vmem>>, vector<8x128xf32>,
    return
  }
}

</mosaic_0001>

<llo_original>
// kernel: tpu_custom_call.1
$region0: #{tpu_custom_call.1}
  #allocation0 [shape = 'u32[]', space=smem, size = 0x4, offset = 0x4, fixed_abs, tag = 'smem constant byte address 0x4 - core index']
  #allocation1 [shape = 'u32[144,128]{1,0:T(1,128)}', space=vmem, size = 0x12000, scoped, tag = 'internal scratch']
  %s0 = inlined_call_operand.hbm [shape: f32[8,128], index: 0, kind: input, shape index: {}]
  %s1 = inlined_call_operand.hbm [shape: f32[8,128], index: 1, kind: output, shape index: {}]
  %s2 = sld [smem:[#allocation0]]
  $region18: #{tpu_custom_call.1} parent=0
    _
  %s4 = ssub.s32 1, %s2
  %s5 = scalar_select 0, %s4, %s2
  $region1: #{tpu_custom_call.1} parent=0
    #allocation2 [shape = 'u8[4096]{0}', space=vmem, size = 0x1000, scoped, tag = 'input window, operand 0, single buffered']
    #allocation3 [shape = 's32[1]{0}', space=sflag, size = 0x4, scoped, tag = 'scoped memory for tpu_custom_call.1']
    #allocation4 [shape = 's32[1]{0}', space=sflag, size = 0x4, scoped, tag = 'scoped memory for tpu_custom_call.1']
    #allocation5 [shape = 'u8[4096]{0}', space=vmem, size = 0x1000, scoped, tag = 'output window, operand 0, single buffered']
    %6 = vsyncpa [#allocation3], 0
    %7 = vsyncpa [#allocation4], 0
    // Predicated region
    $region2: #{tpu_custom_call.1} parent=1 // pred_check
      _
    $region3: #{tpu_custom_call.1} parent=1 // pred_check_branch
      %9 = sbr.rel (0) target = $region5
    $region4: #{tpu_custom_call.1} parent=1 // pred_region
      %s11 = ssub.s32 128, 128
      %12 = vsyncadd [#allocation3], %s11
      %s14 = sshll.u32 [#allocation2], 4
      %s15 = int_to_ptr.vmem [resolvable:$true] %s14
      %17 = dma.hbm_to_vmem [thread:$0]  %s0, 128, %s15, [#allocation3]
    $region5: #{tpu_custom_call.1} parent=1 // pred_fallthru
      _
    // Predicated region
    $region6: #{tpu_custom_call.1} parent=1 // pred_check
      _
    $region7: #{tpu_custom_call.1} parent=1 // pred_check_branch
      %19 = sbr.rel (0) target = $region9
    $region8: #{tpu_custom_call.1} parent=1 // pred_region
      %20 = dma.done [#allocation3], 128
    $region9: #{tpu_custom_call.1} parent=1 // pred_fallthru
      _
    %v21 = vld [vmem:[#allocation2] sm:$0xff]
    %v22 = vmul.f32 %v21, 1.442695
    %v23 = vpow.pop %v22
    %24 = vadd.xlane.f32.xlu0 %v23
    %v25 = vpop.xlane.xlu0 %24
    %v26 = vrot.slane %v25, 4
    %v27 = vadd.f32 %v25, %v26
    %v28 = vrot.slane %v27, 2
    %v29 = vadd.f32 %v27, %v28
    %v30 = vrot.slane %v29, 1
    %v31 = vadd.f32 %v29, %v30
    %s32 = vtos %v31
    %v33 = vstv %s32
    %v34 = vrcp.pop %v33
    %s35 = vtos %v34
    %v36 = vstv %s35
    %v37 = vmul.f32 %v23, %v36
    %38 = vst [vmem:[#allocation5] sm:$0xff] %v37
    // Predicated region
    $region10: #{tpu_custom_call.1} parent=1 // pred_check
      _
    $region11: #{tpu_custom_call.1} parent=1 // pred_check_branch
      %40 = sbr.rel (0) target = $region13
    $region12: #{tpu_custom_call.1} parent=1 // pred_region
      %s42 = ssub.s32 128, 128
      %43 = vsyncadd [#allocation4], %s42
      %s45 = sshll.u32 [#allocation5], 4
      %s46 = int_to_ptr.vmem [resolvable:$true] %s45
      %48 = dma.vmem_to_hbm [thread:$0]  %s46, 128, %s1, [#allocation4]
    $region13: #{tpu_custom_call.1} parent=1 // pred_fallthru
      _
    // Predicated region
    $region14: #{tpu_custom_call.1} parent=1 // pred_check
      _
    $region15: #{tpu_custom_call.1} parent=1 // pred_check_branch
      %50 = sbr.rel (0) target = $region17
    $region16: #{tpu_custom_call.1} parent=1 // pred_region
      %51 = dma.done [#allocation4], 128
    $region17: #{tpu_custom_call.1} parent=1 // pred_fallthru
      _
    %52 = vsyncpa [#allocation3], 1
    %53 = vsyncpa [#allocation4], 1

</llo_original>
